<compile_context>
chip_gen: v5e
topology: v5e:2x2
jax: 0.10.0
libtpu: 0.0.40
codegen_flags: <defaults>
</compile_context>

<pallas_src>
import functools

import jax
import jax.numpy as jnp
from jax.experimental import pallas as pl
from jax.experimental.pallas import tpu as pltpu

MiB = 1024 * 1024


def _round_up(a, b):
    return ((a + b - 1) // b) * b


def _vmem_limit_bytes():
    """Per-chip scoped-VMEM budget: <=48 MiB on v7x (64 MiB/TC), 96 MiB on v5e/v6e."""
    try:
        cap = int(pltpu.get_tpu_info().vmem_capacity_bytes)
    except Exception:
        cap = 64 * MiB
    return 48 * MiB if cap <= 64 * MiB else 96 * MiB


def _pick_tiles_b(n_nodes, c_pad, co_pad, vmem_limit):
    """Decoupled (TM, TK) for the aggregation kernel, sized against the VMEM budget."""
    n128 = _round_up(max(n_nodes, 1), 128)
    tk = n128 if n128 <= 1024 else 1024          # long adj DMA rows / few acc RMW rounds
    n_pad = _round_up(max(n_nodes, 1), tk)
    budget = vmem_limit - 8 * MiB                # pipeline / compiler headroom
    tm = 128
    for cand in (2048, 1024, 512, 256, 128):
        if cand > n_pad or n_pad % cand != 0:
            continue
        need = (2 * cand * tk                    # adj int8, double-buffered
                + 2 * tk * c_pad * 2             # h bf16
                + 2 * cand * c_pad * 2           # xn bf16
                + 2 * cand * 128 * 4             # inv_deg (lane-padded in VMEM)
                + 2 * cand * co_pad * 4          # out f32
                + cand * c_pad * 4               # f32 accumulator scratch
                + 2 * 2 * c_pad * co_pad * 2     # Wl, Wr bf16 (double-buffered)
                + 2 * co_pad * 4)                # bias
        if need <= budget:
            tm = cand
            break
    return tm, tk, n_pad


def _pick_tile_a(n_pad, c_pad, vmem_limit):
    budget = vmem_limit - 8 * MiB - 2 * c_pad * c_pad * 2   # Wp double-buffered
    tm = 128
    for cand in (1024, 512, 256, 128):
        if cand > n_pad or n_pad % cand != 0:
            continue
        need = 2 * cand * c_pad * 2 + 4 * cand * c_pad * 2 + 8 * c_pad * 4
        if need <= budget:
            tm = cand
            break
    return tm


# --------------------- Kernel A: LayerNorm + ReLU + project -------------------
def preprocess_kernel(x_ref, gamma_ref, beta_ref, wp_ref, bp_ref,
                      xn_ref, h_ref, *, c_in):
    # x streamed as bf16; LayerNorm statistics accumulated in f32 (two-pass, torch-style).
    x = x_ref[...].astype(jnp.float32)                    # (TM, Cpad)
    c_pad = x.shape[-1]
    inv_c = 1.0 / c_in
    mu = jnp.sum(x, axis=-1, keepdims=True) * inv_c       # padded lanes are 0 -> exact mean
    d = x - mu
    if c_in != c_pad:                                     # mask padded lanes out of the variance
        lane = jax.lax.broadcasted_iota(jnp.int32, x.shape, 1)
        d = jnp.where(lane < c_in, d, 0.0)
    var = jnp.sum(d * d, axis=-1, keepdims=True) * inv_c  # biased variance (torch LN)
    xn = d * jax.lax.rsqrt(var + 1e-5)
    xn = xn * gamma_ref[...] + beta_ref[...]              # padded gamma/beta = 0 -> padded lanes 0
    xn = jnp.maximum(xn, 0.0)
    # TODO(synk): eval-mode only; the training-time dropout_mask multiply is skipped.
    xn_bf = xn.astype(jnp.bfloat16)
    xn_ref[...] = xn_bf
    # SAGEConv.project: h = relu(xn @ Wp + bp), bf16 operands, f32 accumulation.
    h = jnp.dot(xn_bf, wp_ref[...], preferred_element_type=jnp.float32) + bp_ref[...]
    h_ref[...] = jnp.maximum(h, 0.0).astype(jnp.bfloat16)


# ---------------- Kernel B: mean aggregation + lin_l / lin_r ------------------
def aggregate_kernel(adj_ref, h_ref, xn_ref, inv_ref, wl_ref, wr_ref, bl_ref,
                     o_ref, acc_ref):
    k = pl.program_id(1)

    @pl.when(k == 0)
    def _():
        acc_ref[...] = jnp.zeros_like(acc_ref)

    # Stream one (TM, TK) int8 adjacency tile; upcast to bf16 in VMEM right before the
    # MXU dot (the convert hides under the adjacency DMA).
    a = adj_ref[...].astype(jnp.bfloat16)
    acc_ref[...] += jnp.dot(a, h_ref[...], preferred_element_type=jnp.float32)

    @pl.when(k == pl.num_programs(1) - 1)
    def _():
        # scatter-mean: inv_deg precomputed in the wrapper (empty rows -> 0).
        agg = (acc_ref[...] * inv_ref[...]).astype(jnp.bfloat16)
        # Two K=Cpad dots instead of concat + one K=2*Cpad dot: same MXU work, no
        # (TM, 2*Cpad) staging buffer round-trip through VMEM.
        out = jnp.dot(agg, wl_ref[...], preferred_element_type=jnp.float32)
        out = out + jnp.dot(xn_ref[...], wr_ref[...], preferred_element_type=jnp.float32)
        o_ref[...] = out + bl_ref[...]


# ------------------------------ JAX wrapper -----------------------------------
def gnn_block(x, edge_index, params):
    """x: [N, Cin] float32, edge_index: [2, E] int32 (row 0 = src, row 1 = dst)."""
    N, Cin = x.shape
    Cout = params["wl"].shape[1]

    c_pad = _round_up(Cin, 128)
    co_pad = _round_up(Cout, 128)
    f32, bf16 = jnp.float32, jnp.bfloat16

    vmem_limit = _vmem_limit_bytes()
    tm_b, tk_b, n_pad = _pick_tiles_b(N, c_pad, co_pad, vmem_limit)
    tm_a = _pick_tile_a(n_pad, c_pad, vmem_limit)

    # ---- pad features / parameters to lane-dense (128-multiple) shapes ----
    xp = jnp.zeros((n_pad, c_pad), bf16).at[:N, :Cin].set(x.astype(bf16))
    gamma = jnp.zeros((1, c_pad), f32).at[0, :Cin].set(params["gamma"])
    beta = jnp.zeros((1, c_pad), f32).at[0, :Cin].set(params["beta"])
    wp = jnp.zeros((c_pad, c_pad), bf16).at[:Cin, :Cin].set(params["wp"].astype(bf16))
    bp = jnp.zeros((1, c_pad), f32).at[0, :Cin].set(params["bp"])
    wl = jnp.zeros((c_pad, co_pad), bf16).at[:Cin, :Cout].set(params["wl"].astype(bf16))
    wr = jnp.zeros((c_pad, co_pad), bf16).at[:Cin, :Cout].set(params["wr"].astype(bf16))
    bl = jnp.zeros((1, co_pad), f32).at[0, :Cout].set(params["bl"])

    # ---- int8 adjacency counts A[dst, src] + precomputed 1/in-degree ----
    # TODO(synk): replace with CSR + scalar-prefetch gather for very large sparse graphs.
    src, dst = edge_index[0], edge_index[1]
    counts = jnp.zeros((n_pad, n_pad), jnp.int32).at[dst, src].add(1)
    adj = jnp.minimum(counts, 127).astype(jnp.int8)     # exact for edge multiplicity <= 127
    deg = jnp.zeros((n_pad,), f32).at[dst].add(1.0)
    inv_deg = jnp.where(deg > 0.0, 1.0 / jnp.maximum(deg, 1.0), 0.0).reshape(n_pad, 1)

    cparams_rows = pltpu.CompilerParams(
        dimension_semantics=("parallel",), vmem_limit_bytes=vmem_limit)
    cparams_agg = pltpu.CompilerParams(
        dimension_semantics=("parallel", "arbitrary"), vmem_limit_bytes=vmem_limit)

    # ---- Kernel A: LayerNorm + ReLU + project (row-tiled, auto-pipelined) ----
    xn, h = pl.pallas_call(
        functools.partial(preprocess_kernel, c_in=Cin),
        out_shape=(jax.ShapeDtypeStruct((n_pad, c_pad), bf16),
                   jax.ShapeDtypeStruct((n_pad, c_pad), bf16)),
        grid=(n_pad // tm_a,),
        in_specs=[
            pl.BlockSpec((tm_a, c_pad), lambda i: (i, 0)),      # x rows (bf16)
            pl.BlockSpec((1, c_pad), lambda i: (0, 0)),         # gamma (resident)
            pl.BlockSpec((1, c_pad), lambda i: (0, 0)),         # beta
            pl.BlockSpec((c_pad, c_pad), lambda i: (0, 0)),     # Wp
            pl.BlockSpec((1, c_pad), lambda i: (0, 0)),         # bp
        ],
        out_specs=(pl.BlockSpec((tm_a, c_pad), lambda i: (i, 0)),
                   pl.BlockSpec((tm_a, c_pad), lambda i: (i, 0))),
        compiler_params=cparams_rows,
    )(xp, gamma, beta, wp, bp)

    # ---- Kernel B: streamed int8 mean aggregation + lin_l / lin_r epilogue ----
    flops = 2 * n_pad * n_pad * c_pad + 4 * n_pad * c_pad * co_pad
    bytes_accessed = (n_pad * n_pad                           # adj int8
                      + (n_pad // tm_b) * n_pad * c_pad * 2   # h re-streamed per row tile
                      + n_pad * c_pad * 2                     # xn
                      + n_pad * co_pad * 4                    # out
                      + n_pad * 4)                            # inv_deg
    out = pl.pallas_call(
        aggregate_kernel,
        out_shape=jax.ShapeDtypeStruct((n_pad, co_pad), f32),
        grid=(n_pad // tm_b, n_pad // tk_b),
        in_specs=[
            pl.BlockSpec((tm_b, tk_b), lambda i, k: (i, k)),        # adj tile (int8, streamed)
            pl.BlockSpec((tk_b, c_pad), lambda i, k: (k, 0)),       # h source block
            pl.BlockSpec((tm_b, c_pad), lambda i, k: (i, 0)),       # xn row block (lin_r)
            pl.BlockSpec((tm_b, 1), lambda i, k: (i, 0)),           # 1/in-degree
            pl.BlockSpec((c_pad, co_pad), lambda i, k: (0, 0)),     # Wl (resident)
            pl.BlockSpec((c_pad, co_pad), lambda i, k: (0, 0)),     # Wr (resident)
            pl.BlockSpec((1, co_pad), lambda i, k: (0, 0)),         # bl
        ],
        out_specs=pl.BlockSpec((tm_b, co_pad), lambda i, k: (i, 0)),
        scratch_shapes=[pltpu.VMEM((tm_b, c_pad), f32)],            # f32 accumulator
        compiler_params=cparams_agg,
        cost_estimate=pl.CostEstimate(flops=flops, transcendentals=0,
                                      bytes_accessed=bytes_accessed),
    )(adj, h, xn, inv_deg, wl, wr, bl)

    return out[:N, :Cout]


# --------------------------- deterministic params ------------------------------
def init_params(key, in_channels, out_channels):
    ks = jax.random.split(key, 5)
    scale_in = 1.0 / jnp.sqrt(in_channels)
    return {
        # LayerNorm affine
        "gamma": jnp.ones((in_channels,), jnp.float32),
        "beta": jnp.zeros((in_channels,), jnp.float32),
        # SAGEConv.lin (project): Linear(in, in, bias=True), stored transposed [in, in]
        "wp": jax.random.uniform(ks[0], (in_channels, in_channels), jnp.float32,
                                 -scale_in, scale_in),
        "bp": jax.random.uniform(ks[1], (in_channels,), jnp.float32, -scale_in, scale_in),
        # SAGEConv.lin_l: Linear(in, out, bias=True), transposed [in, out]
        "wl": jax.random.uniform(ks[2], (in_channels, out_channels), jnp.float32,
                                 -scale_in, scale_in),
        "bl": jax.random.uniform(ks[3], (out_channels,), jnp.float32, -scale_in, scale_in),
        # SAGEConv.lin_r: Linear(in, out, bias=False), transposed [in, out]
        "wr": jax.random.uniform(ks[4], (in_channels, out_channels), jnp.float32,
                                 -scale_in, scale_in),
    }


if __name__ == "__main__":
    key = jax.random.PRNGKey(0)
    k_x, k_e, k_p = jax.random.split(key, 3)

    N, Cin, Cout, E = 16, 32, 32, 40
    x = jax.random.normal(k_x, (N, Cin), jnp.float32)
    edge_index = jax.random.randint(k_e, (2, E), 0, N, jnp.int32)
    params = init_params(k_p, Cin, Cout)

    out = gnn_block(x, edge_index, params)
    jax.block_until_ready(out)
    assert out.shape == (N, Cout)
    assert bool(jnp.all(jnp.isfinite(out)))
    print("KERNEL_OK")
</pallas_src>

<mosaic_0001>
module attributes {stable_mosaic.version = 11 : i64} {
  func.func @preprocess_kernel(%arg0: i32, %arg1: memref<128x128xbf16, #tpu.memory_space<vmem>>, %arg2: memref<1x128xf32, #tpu.memory_space<vmem>>, %arg3: memref<1x128xf32, #tpu.memory_space<vmem>>, %arg4: memref<128x128xbf16, #tpu.memory_space<vmem>>, %arg5: memref<1x128xf32, #tpu.memory_space<vmem>>, %arg6: memref<128x128xbf16, #tpu.memory_space<vmem>>, %arg7: memref<128x128xbf16, #tpu.memory_space<vmem>>) attributes {dimension_semantics = [#tpu.dimension_semantics<parallel>], iteration_bounds = array<i64: 1>, scalar_prefetch = 0 : i64, scratch_operands = 0 : i64, tpu.core_type = #tpu.core_type<tc>, window_params = [{transform_indices = @transform_0, window_bounds = array<i64: 128, 128>}, {pipeline_mode = #tpu.pipeline_mode<synchronous>, transform_indices = @transform_1, window_bounds = array<i64: 1, 128>}, {pipeline_mode = #tpu.pipeline_mode<synchronous>, transform_indices = @transform_2, window_bounds = array<i64: 1, 128>}, {pipeline_mode = #tpu.pipeline_mode<synchronous>, transform_indices = @transform_3, window_bounds = array<i64: 128, 128>}, {pipeline_mode = #tpu.pipeline_mode<synchronous>, transform_indices = @transform_4, window_bounds = array<i64: 1, 128>}, {transform_indices = @transform_5, window_bounds = array<i64: 128, 128>}, {transform_indices = @transform_6, window_bounds = array<i64: 128, 128>}]} {
    %c0 = arith.constant 0 : index
    %c0_0 = arith.constant 0 : index
    %0 = vector.load %arg1[%c0, %c0_0] : memref<128x128xbf16, #tpu.memory_space<vmem>>, vector<128x128xbf16>
    %1 = arith.extf %0 : vector<128x128xbf16> to vector<128x128xf32>
    %cst = arith.constant dense<0.000000e+00> : vector<128xf32>
    %2 = vector.multi_reduction <add>, %1, %cst [1] : vector<128x128xf32> to vector<128xf32>
    %3 = vector.shape_cast %2 : vector<128xf32> to vector<128x1xf32>
    %cst_1 = arith.constant 3.125000e-02 : f32
    %4 = vector.broadcast %cst_1 : f32 to vector<128x1xf32>
    %5 = arith.mulf %3, %4 : vector<128x1xf32>
    %6 = vector.broadcast %5 : vector<128x1xf32> to vector<128x128xf32>
    %7 = arith.subf %1, %6 : vector<128x128xf32>
    %8 = tpu.iota {dimensions = array<i32: 1>} : vector<128x128xi32>
    %c32_i32 = arith.constant 32 : i32
    %9 = vector.broadcast %c32_i32 : i32 to vector<128x128xi32>
    %10 = arith.cmpi slt, %8, %9 : vector<128x128xi32>
    %cst_2 = arith.constant 0.000000e+00 : f32
    %11 = vector.broadcast %cst_2 : f32 to vector<128x128xf32>
    %12 = arith.select %10, %7, %11 : vector<128x128xi1>, vector<128x128xf32>
    %13 = arith.mulf %12, %12 : vector<128x128xf32>
    %cst_3 = arith.constant dense<0.000000e+00> : vector<128xf32>
    %14 = vector.multi_reduction <add>, %13, %cst_3 [1] : vector<128x128xf32> to vector<128xf32>
    %15 = vector.shape_cast %14 : vector<128xf32> to vector<128x1xf32>
    %cst_4 = arith.constant 3.125000e-02 : f32
    %16 = vector.broadcast %cst_4 : f32 to vector<128x1xf32>
    %17 = arith.mulf %15, %16 : vector<128x1xf32>
    %cst_5 = arith.constant 9.99999974E-6 : f32
    %18 = vector.broadcast %cst_5 : f32 to vector<128x1xf32>
    %19 = arith.addf %17, %18 : vector<128x1xf32>
    %20 = math.rsqrt %19 : vector<128x1xf32>
    %21 = vector.broadcast %20 : vector<128x1xf32> to vector<128x128xf32>
    %22 = arith.mulf %12, %21 : vector<128x128xf32>
    %c0_6 = arith.constant 0 : index
    %c0_7 = arith.constant 0 : index
    %23 = vector.load %arg2[%c0_6, %c0_7] : memref<1x128xf32, #tpu.memory_space<vmem>>, vector<1x128xf32>
    %24 = vector.broadcast %23 : vector<1x128xf32> to vector<128x128xf32>
    %25 = arith.mulf %22, %24 : vector<128x128xf32>
    %c0_8 = arith.constant 0 : index
    %c0_9 = arith.constant 0 : index
    %26 = vector.load %arg3[%c0_8, %c0_9] : memref<1x128xf32, #tpu.memory_space<vmem>>, vector<1x128xf32>
    %27 = vector.broadcast %26 : vector<1x128xf32> to vector<128x128xf32>
    %28 = arith.addf %25, %27 : vector<128x128xf32>
    %cst_10 = arith.constant 0.000000e+00 : f32
    %29 = vector.broadcast %cst_10 : f32 to vector<128x128xf32>
    %30 = arith.maximumf %28, %29 : vector<128x128xf32>
    %31 = arith.truncf %30 : vector<128x128xf32> to vector<128x128xbf16>
    %c0_11 = arith.constant 0 : index
    %c0_12 = arith.constant 0 : index
    %32 = vector.load %arg6[%c0_11, %c0_12] : memref<128x128xbf16, #tpu.memory_space<vmem>>, vector<128x128xbf16>
    tpu.vector_store %arg6[%c0_11, %c0_12], %31 {strides = array<i32>} : memref<128x128xbf16, #tpu.memory_space<vmem>>, vector<128x128xbf16>,
    %c0_13 = arith.constant 0 : index
    %c0_14 = arith.constant 0 : index
    %33 = vector.load %arg4[%c0_13, %c0_14] : memref<128x128xbf16, #tpu.memory_space<vmem>>, vector<128x128xbf16>
    %cst_15 = arith.constant dense<0.000000e+00> : vector<128x128xf32>
    %34 = tpu.matmul %31, %33, %cst_15 {dimension_numbers = #tpu.dot_dimension_numbers<[1], [0], [0], [1], [0, 0, 1, 1], [], []>} : vector<128x128xbf16>, vector<128x128xbf16>, vector<128x128xf32> -> vector<128x128xf32>
    %c0_16 = arith.constant 0 : index
    %c0_17 = arith.constant 0 : index
    %35 = vector.load %arg5[%c0_16, %c0_17] : memref<1x128xf32, #tpu.memory_space<vmem>>, vector<1x128xf32>
    %36 = vector.broadcast %35 : vector<1x128xf32> to vector<128x128xf32>
    %37 = arith.addf %34, %36 : vector<128x128xf32>
    %cst_18 = arith.constant 0.000000e+00 : f32
    %38 = vector.broadcast %cst_18 : f32 to vector<128x128xf32>
    %39 = arith.maximumf %37, %38 : vector<128x128xf32>
    %40 = arith.truncf %39 : vector<128x128xf32> to vector<128x128xbf16>
    %c0_19 = arith.constant 0 : index
    %c0_20 = arith.constant 0 : index
    %41 = vector.load %arg7[%c0_19, %c0_20] : memref<128x128xbf16, #tpu.memory_space<vmem>>, vector<128x128xbf16>
    tpu.vector_store %arg7[%c0_19, %c0_20], %40 {strides = array<i32>} : memref<128x128xbf16, #tpu.memory_space<vmem>>, vector<128x128xbf16>,
    return
  }
  func.func @transform_0(%arg0: i32) -> (i32, i32) {
    %c0_i32 = arith.constant 0 : i32
    %c0_i32_0 = arith.constant 0 : i32
    return %arg0, %c0_i32 : i32, i32
  }
  func.func @transform_1(%arg0: i32) -> (i32, i32) {
    %c0_i32 = arith.constant 0 : i32
    %c0_i32_0 = arith.constant 0 : i32
    %c0_i32_1 = arith.constant 0 : i32
    return %c0_i32, %c0_i32_0 : i32, i32
  }
  func.func @transform_2(%arg0: i32) -> (i32, i32) {
    %c0_i32 = arith.constant 0 : i32
    %c0_i32_0 = arith.constant 0 : i32
    %c0_i32_1 = arith.constant 0 : i32
    return %c0_i32, %c0_i32_0 : i32, i32
  }
  func.func @transform_3(%arg0: i32) -> (i32, i32) {
    %c0_i32 = arith.constant 0 : i32
    %c0_i32_0 = arith.constant 0 : i32
    %c0_i32_1 = arith.constant 0 : i32
    return %c0_i32, %c0_i32_0 : i32, i32
  }
  func.func @transform_4(%arg0: i32) -> (i32, i32) {
    %c0_i32 = arith.constant 0 : i32
    %c0_i32_0 = arith.constant 0 : i32
    %c0_i32_1 = arith.constant 0 : i32
    return %c0_i32, %c0_i32_0 : i32, i32
  }
  func.func @transform_5(%arg0: i32) -> (i32, i32) {
    %c0_i32 = arith.constant 0 : i32
    %c0_i32_0 = arith.constant 0 : i32
    return %arg0, %c0_i32 : i32, i32
  }
  func.func @transform_6(%arg0: i32) -> (i32, i32) {
    %c0_i32 = arith.constant 0 : i32
    %c0_i32_0 = arith.constant 0 : i32
    return %arg0, %c0_i32 : i32, i32
  }
}

</mosaic_0001>

<llo_original>
// kernel: tpu_custom_call.1
$region0: #{tpu_custom_call.1}
  #allocation0 [shape = 'u32[]', space=smem, size = 0x4, offset = 0x4, fixed_abs, tag = 'smem constant byte address 0x4 - core index']
  #allocation1 [shape = 'u32[72,128]{1,0:T(1,128)}', space=vmem, size = 0x9000, scoped, tag = 'internal scratch']
  %s0 = inlined_call_operand.hbm [shape: bf16[128,128], index: 0, kind: input, shape index: {}]
  %s1 = inlined_call_operand.hbm [shape: f32[1,128], index: 1, kind: input, shape index: {}]
  %s2 = inlined_call_operand.vmem [shape: f32[1,128], index: 2, kind: input, shape index: {}]
  %s3 = inlined_call_operand.hbm [shape: bf16[128,128], index: 3, kind: input, shape index: {}]
  %s4 = inlined_call_operand.vmem [shape: f32[1,128], index: 4, kind: input, shape index: {}]
  %s5 = inlined_call_operand.hbm [shape: bf16[128,128], index: 5, kind: output, shape index: {0}]
  %s6 = inlined_call_operand.hbm [shape: bf16[128,128], index: 6, kind: output, shape index: {1}]
  %7 = xla_tuple %s5, %s6
  %s8 = sld [smem:[#allocation0]]
  $region50: #{tpu_custom_call.1} parent=0
    _
  %s10 = ssub.s32 1, %s8
  %s11 = scalar_select 0, %s10, %s8
  $region1: #{tpu_custom_call.1} parent=0
    #allocation2 [shape = 'u8[32768]{0}', space=vmem, size = 0x8000, scoped, tag = 'input window, operand 0, single buffered']
    #allocation3 [shape = 's32[1]{0}', space=sflag, size = 0x4, scoped, tag = 'scoped memory for tpu_custom_call.1']
    #allocation4 [shape = 's32[1]{0}', space=sflag, size = 0x4, scoped, tag = 'scoped memory for tpu_custom_call.1']
    #allocation5 [shape = 'u8[512]{0}', space=vmem, size = 0x400, scoped, tag = 'input window, operand 1, single buffered']
    #allocation6 [shape = 's32[1]{0}', space=sflag, size = 0x4, scoped, tag = 'scoped memory for tpu_custom_call.1']
    #allocation7 [shape = 'u8[32768]{0}', space=vmem, size = 0x8000, scoped, tag = 'input window, operand 3, single buffered']
    #allocation8 [shape = 'u8[32768]{0}', space=vmem, size = 0x8000, scoped, tag = 'output window, operand 0, single buffered']
    #allocation9 [shape = 'u8[32768]{0}', space=vmem, size = 0x8000, scoped, tag = 'output window, operand 1, single buffered']
    #allocation10 [shape = 's32[1]{0}', space=sflag, size = 0x4, scoped, tag = 'scoped memory for tpu_custom_call.1']
    %12 = vsyncpa [#allocation3], 0
    %13 = vsyncpa [#allocation6], 0
    %14 = vsyncpa [#allocation4], 0
    %15 = vsyncpa [#allocation10], 0
    // Predicated region
    $region2: #{tpu_custom_call.1} parent=1 // pred_check
      _
    $region3: #{tpu_custom_call.1} parent=1 // pred_check_branch
      %17 = sbr.rel (0) target = $region5
    $region4: #{tpu_custom_call.1} parent=1 // pred_region
      %19 = vsyncadd [#allocation3], 0
      %s20 = sshll.u32 %s0, 4
      %s21 = int_to_ptr.hbm [resolvable:$true] %s20
      %s22 = sshll.u32 [#allocation2], 4
      %s23 = int_to_ptr.vmem [resolvable:$true] %s22
      %28 = dma.hbm_to_vmem [thread:$0]  %s21, 1024, %s23, [#allocation3], 64, 64, 4
    $region5: #{tpu_custom_call.1} parent=1 // pred_fallthru
      _
    // Predicated region
    $region6: #{tpu_custom_call.1} parent=1 // pred_check
      _
    $region7: #{tpu_custom_call.1} parent=1 // pred_check_branch
      %30 = sbr.rel (0) target = $region9
    $region8: #{tpu_custom_call.1} parent=1 // pred_region
      %32 = vsyncadd [#allocation6], 0
      %s34 = sshll.u32 %s1, 4
      %s35 = int_to_ptr.hbm [resolvable:$true] %s34
      %s36 = sshll.u32 [#allocation5], 4
      %s37 = int_to_ptr.vmem [resolvable:$true] %s36
      %39 = dma.hbm_to_vmem [thread:$0]  %s35, 16, %s37, [#allocation6]
    $region9: #{tpu_custom_call.1} parent=1 // pred_fallthru
      _
    // Predicated region
    $region10: #{tpu_custom_call.1} parent=1 // pred_check
      _
    $region11: #{tpu_custom_call.1} parent=1 // pred_check_branch
      %41 = sbr.rel (0) target = $region13
    $region12: #{tpu_custom_call.1} parent=1 // pred_region
      _
    $region13: #{tpu_custom_call.1} parent=1 // pred_fallthru
      _
    // Predicated region
    $region14: #{tpu_custom_call.1} parent=1 // pred_check
      _
    $region15: #{tpu_custom_call.1} parent=1 // pred_check_branch
      %43 = sbr.rel (0) target = $region17
    $region16: #{tpu_custom_call.1} parent=1 // pred_region
      %45 = vsyncadd [#allocation6], 0
      %s46 = sshll.u32 %s3, 4
      %s47 = int_to_ptr.hbm [resolvable:$true] %s46
      %s48 = sshll.u32 [#allocation7], 4
      %s49 = int_to_ptr.vmem [resolvable:$true] %s48
      %54 = dma.hbm_to_vmem [thread:$0]  %s47, 1024, %s49, [#allocation6], 64, 64, 4
    $region17: #{tpu_custom_call.1} parent=1 // pred_fallthru
      _
    // Predicated region
    $region18: #{tpu_custom_call.1} parent=1 // pred_check
      _
    $region19: #{tpu_custom_call.1} parent=1 // pred_check_branch
      %56 = sbr.rel (0) target = $region21
    $region20: #{tpu_custom_call.1} parent=1 // pred_region
      _
    $region21: #{tpu_custom_call.1} parent=1 // pred_fallthru
      _
    // Predicated region
    $region22: #{tpu_custom_call.1} parent=1 // pred_check
      _
    $region23: #{tpu_custom_call.1} parent=1 // pred_check_branch
      %58 = sbr.rel (0) target = $region25
    $region24: #{tpu_custom_call.1} parent=1 // pred_region
      %60 = dma.done [#allocation3], 1024
    $region25: #{tpu_custom_call.1} parent=1 // pred_fallthru
      _
    // Predicated region
    $region26: #{tpu_custom_call.1} parent=1 // pred_check
      _
    $region27: #{tpu_custom_call.1} parent=1 // pred_check_branch
      %62 = sbr.rel (0) target = $region29
    $region28: #{tpu_custom_call.1} parent=1 // pred_region
      %64 = dma.done [#allocation6], 16
    $region29: #{tpu_custom_call.1} parent=1 // pred_fallthru
      _
    // Predicated region
    $region30: #{tpu_custom_call.1} parent=1 // pred_check
      _
    $region31: #{tpu_custom_call.1} parent=1 // pred_check_branch
      %66 = sbr.rel (0) target = $region33
    $region32: #{tpu_custom_call.1} parent=1 // pred_region
      %68 = dma.done [#allocation6], 1024
    $region33: #{tpu_custom_call.1} parent=1 // pred_fallthru
      _
    %v69 = vld [vmem:[#allocation2] sm:$0xf]
    %v70 = vld [vmem:[#allocation2 + $0x4] sm:$0xf]
    %v71 = vld [vmem:[#allocation2 + $0x8] sm:$0xf]
    %v72 = vld [vmem:[#allocation2 + $0xc] sm:$0xf]
    %v73 = vld [vmem:[#allocation2 + $0x10] sm:$0xf]
    %v74 = vld [vmem:[#allocation2 + $0x14] sm:$0xf]
    %v75 = vld [vmem:[#allocation2 + $0x18] sm:$0xf]
    %v76 = vld [vmem:[#allocation2 + $0x1c] sm:$0xf]
    %v77 = vld [vmem:[#allocation2 + $0x20] sm:$0xf]
    %v78 = vld [vmem:[#allocation2 + $0x24] sm:$0xf]
    %v79 = vld [vmem:[#allocation2 + $0x28] sm:$0xf]
    %v80 = vld [vmem:[#allocation2 + $0x2c] sm:$0xf]
    %v81 = vld [vmem:[#allocation2 + $0x30] sm:$0xf]
    %v82 = vld [vmem:[#allocation2 + $0x34] sm:$0xf]
    %v83 = vld [vmem:[#allocation2 + $0x38] sm:$0xf]
    %v84 = vld [vmem:[#allocation2 + $0x3c] sm:$0xf]
    %v85 = vunpack.c.l.bf16 %v69
    %v86 = vunpack.c.l.bf16 %v70
    %v87 = vunpack.c.l.bf16 %v71
    %v88 = vunpack.c.l.bf16 %v72
    %v89 = vunpack.c.l.bf16 %v73
    %v90 = vunpack.c.l.bf16 %v74
    %v91 = vunpack.c.l.bf16 %v75
    %v92 = vunpack.c.l.bf16 %v76
    %v93 = vunpack.c.l.bf16 %v77
    %v94 = vunpack.c.l.bf16 %v78
    %v95 = vunpack.c.l.bf16 %v79
    %v96 = vunpack.c.l.bf16 %v80
    %v97 = vunpack.c.l.bf16 %v81
    %v98 = vunpack.c.l.bf16 %v82
    %v99 = vunpack.c.l.bf16 %v83
    %v100 = vunpack.c.l.bf16 %v84
    %101 = vadd.xlane.f32.xlu0 %v85
    %v102 = vpop.xlane.xlu0 %101
    %103 = vadd.xlane.f32.xlu0 %v86
    %v104 = vpop.xlane.xlu0 %103
    %105 = vadd.xlane.f32.xlu0 %v87
    %v106 = vpop.xlane.xlu0 %105
    %107 = vadd.xlane.f32.xlu0 %v88
    %v108 = vpop.xlane.xlu0 %107
    %109 = vadd.xlane.f32.xlu0 %v89
    %v110 = vpop.xlane.xlu0 %109
    %111 = vadd.xlane.f32.xlu0 %v90
    %v112 = vpop.xlane.xlu0 %111
    %113 = vadd.xlane.f32.xlu0 %v91
    %v114 = vpop.xlane.xlu0 %113
    %115 = vadd.xlane.f32.xlu0 %v92
    %v116 = vpop.xlane.xlu0 %115
    %117 = vadd.xlane.f32.xlu0 %v93
    %v118 = vpop.xlane.xlu0 %117
    %119 = vadd.xlane.f32.xlu0 %v94
    %v120 = vpop.xlane.xlu0 %119
    %121 = vadd.xlane.f32.xlu0 %v95
    %v122 = vpop.xlane.xlu0 %121
    %123 = vadd.xlane.f32.xlu0 %v96
    %v124 = vpop.xlane.xlu0 %123
    %125 = vadd.xlane.f32.xlu0 %v97
    %v126 = vpop.xlane.xlu0 %125
    %127 = vadd.xlane.f32.xlu0 %v98
    %v128 = vpop.xlane.xlu0 %127
    %129 = vadd.xlane.f32.xlu0 %v99
    %v130 = vpop.xlane.xlu0 %129
    %131 = vadd.xlane.f32.xlu0 %v100
    %v132 = vpop.xlane.xlu0 %131
    %v133 = vmul.f32 %v102, 0.03125
    %v134 = vmul.f32 %v104, 0.03125
    %v135 = vmul.f32 %v106, 0.03125
    %v136 = vmul.f32 %v108, 0.03125
    %v137 = vmul.f32 %v110, 0.03125
    %v138 = vmul.f32 %v112, 0.03125
    %v139 = vmul.f32 %v114, 0.03125
    %v140 = vmul.f32 %v116, 0.03125
    %v141 = vmul.f32 %v118, 0.03125
    %v142 = vmul.f32 %v120, 0.03125
    %v143 = vmul.f32 %v122, 0.03125
    %v144 = vmul.f32 %v124, 0.03125
    %v145 = vmul.f32 %v126, 0.03125
    %v146 = vmul.f32 %v128, 0.03125
    %v147 = vmul.f32 %v130, 0.03125
    %v148 = vmul.f32 %v132, 0.03125
    %v149 = vsub.f32 %v85, %v133
    %v150 = vsub.f32 %v86, %v134
    %v151 = vsub.f32 %v87, %v135
    %v152 = vsub.f32 %v88, %v136
    %v153 = vsub.f32 %v89, %v137
    %v154 = vsub.f32 %v90, %v138
    %v155 = vsub.f32 %v91, %v139
    %v156 = vsub.f32 %v92, %v140
    %v157 = vsub.f32 %v93, %v141
    %v158 = vsub.f32 %v94, %v142
    %v159 = vsub.f32 %v95, %v143
    %v160 = vsub.f32 %v96, %v144
    %v161 = vsub.f32 %v97, %v145
    %v162 = vsub.f32 %v98, %v146
    %v163 = vsub.f32 %v99, %v147
    %v164 = vsub.f32 %v100, %v148
    %v165 = vlaneseq
    %v166 = vand.u32 %v165, 127
    %vm167 = vcmp.lt.s32.totalorder %v166, 32
    %v168 = vsel %vm167, %v149, 0.0
    %v169 = vsel %vm167, %v150, 0.0
    %v170 = vsel %vm167, %v151, 0.0
    %v171 = vsel %vm167, %v152, 0.0
    %v172 = vsel %vm167, %v153, 0.0
    %v173 = vsel %vm167, %v154, 0.0
    %v174 = vsel %vm167, %v155, 0.0
    %v175 = vsel %vm167, %v156, 0.0
    %v176 = vsel %vm167, %v157, 0.0
    %v177 = vsel %vm167, %v158, 0.0
    %v178 = vsel %vm167, %v159, 0.0
    %v179 = vsel %vm167, %v160, 0.0
    %v180 = vsel %vm167, %v161, 0.0
    %v181 = vsel %vm167, %v162, 0.0
    %v182 = vsel %vm167, %v163, 0.0
    %v183 = vsel %vm167, %v164, 0.0
    %v184 = vmul.f32 %v168, %v168
    %v185 = vmul.f32 %v169, %v169
    %v186 = vmul.f32 %v170, %v170
    %v187 = vmul.f32 %v171, %v171
    %v188 = vmul.f32 %v172, %v172
    %v189 = vmul.f32 %v173, %v173
    %v190 = vmul.f32 %v174, %v174
    %v191 = vmul.f32 %v175, %v175
    %v192 = vmul.f32 %v176, %v176
    %v193 = vmul.f32 %v177, %v177
    %v194 = vmul.f32 %v178, %v178
    %v195 = vmul.f32 %v179, %v179
    %v196 = vmul.f32 %v180, %v180
    %v197 = vmul.f32 %v181, %v181
    %v198 = vmul.f32 %v182, %v182
    %v199 = vmul.f32 %v183, %v183
    %200 = vadd.xlane.f32.xlu0 %v184
    %v201 = vpop.xlane.xlu0 %200
    %202 = vadd.xlane.f32.xlu0 %v185
    %v203 = vpop.xlane.xlu0 %202
    %204 = vadd.xlane.f32.xlu0 %v186
    %v205 = vpop.xlane.xlu0 %204
    %206 = vadd.xlane.f32.xlu0 %v187
    %v207 = vpop.xlane.xlu0 %206
    %208 = vadd.xlane.f32.xlu0 %v188
    %v209 = vpop.xlane.xlu0 %208
    %210 = vadd.xlane.f32.xlu0 %v189
    %v211 = vpop.xlane.xlu0 %210
    %212 = vadd.xlane.f32.xlu0 %v190
    %v213 = vpop.xlane.xlu0 %212
    %214 = vadd.xlane.f32.xlu0 %v191
    %v215 = vpop.xlane.xlu0 %214
    %216 = vadd.xlane.f32.xlu0 %v192
    %v217 = vpop.xlane.xlu0 %216
    %218 = vadd.xlane.f32.xlu0 %v193
    %v219 = vpop.xlane.xlu0 %218
    %220 = vadd.xlane.f32.xlu0 %v194
    %v221 = vpop.xlane.xlu0 %220
    %222 = vadd.xlane.f32.xlu0 %v195
    %v223 = vpop.xlane.xlu0 %222
    %224 = vadd.xlane.f32.xlu0 %v196
    %v225 = vpop.xlane.xlu0 %224
    %226 = vadd.xlane.f32.xlu0 %v197
    %v227 = vpop.xlane.xlu0 %226
    %228 = vadd.xlane.f32.xlu0 %v198
    %v229 = vpop.xlane.xlu0 %228
    %230 = vadd.xlane.f32.xlu0 %v199
    %v231 = vpop.xlane.xlu0 %230
    %v232 = vmul.f32 %v201, 0.03125
    %v233 = vmul.f32 %v203, 0.03125
    %v234 = vmul.f32 %v205, 0.03125
    %v235 = vmul.f32 %v207, 0.03125
    %v236 = vmul.f32 %v209, 0.03125
    %v237 = vmul.f32 %v211, 0.03125
    %v238 = vmul.f32 %v213, 0.03125
    %v239 = vmul.f32 %v215, 0.03125
    %v240 = vmul.f32 %v217, 0.03125
    %v241 = vmul.f32 %v219, 0.03125
    %v242 = vmul.f32 %v221, 0.03125
    %v243 = vmul.f32 %v223, 0.03125
    %v244 = vmul.f32 %v225, 0.03125
    %v245 = vmul.f32 %v227, 0.03125
    %v246 = vmul.f32 %v229, 0.03125
    %v247 = vmul.f32 %v231, 0.03125
    %v248 = vadd.f32 %v232, 1e-05
    %v249 = vadd.f32 %v233, 1e-05
    %v250 = vadd.f32 %v234, 1e-05
    %v251 = vadd.f32 %v235, 1e-05
    %v252 = vadd.f32 %v236, 1e-05
    %v253 = vadd.f32 %v237, 1e-05
    %v254 = vadd.f32 %v238, 1e-05
    %v255 = vadd.f32 %v239, 1e-05
    %v256 = vadd.f32 %v240, 1e-05
    %v257 = vadd.f32 %v241, 1e-05
    %v258 = vadd.f32 %v242, 1e-05
    %v259 = vadd.f32 %v243, 1e-05
    %v260 = vadd.f32 %v244, 1e-05
    %v261 = vadd.f32 %v245, 1e-05
    %v262 = vadd.f32 %v246, 1e-05
    %v263 = vadd.f32 %v247, 1e-05
    %v264 = vrsqrt.pop %v248
    %v265 = vmul.f32 %v264, %v248
    %v266 = vmul.f32 %v265, %v264
    %v267 = vmul.f32 0.5, %v266
    %v268 = vsub.f32 1.5, %v267
    %v269 = vmul.f32 %v264, %v268
    %vm270 = vweird.f32 %v248
    %vm271 = vweird.f32 %v264
    %vm272 = vmor %vm270, %vm271
    %v273 = vsel %vm272, %v264, %v269
    %v274 = vrsqrt.pop %v249
    %v275 = vmul.f32 %v274, %v249
    %v276 = vmul.f32 %v275, %v274
    %v277 = vmul.f32 0.5, %v276
    %v278 = vsub.f32 1.5, %v277
    %v279 = vmul.f32 %v274, %v278
    %vm280 = vweird.f32 %v249
    %vm281 = vweird.f32 %v274
    %vm282 = vmor %vm280, %vm281
    %v283 = vsel %vm282, %v274, %v279
    %v284 = vrsqrt.pop %v250
    %v285 = vmul.f32 %v284, %v250
    %v286 = vmul.f32 %v285, %v284
    %v287 = vmul.f32 0.5, %v286
    %v288 = vsub.f32 1.5, %v287
    %v289 = vmul.f32 %v284, %v288
    %vm290 = vweird.f32 %v250
    %vm291 = vweird.f32 %v284
    %vm292 = vmor %vm290, %vm291
    %v293 = vsel %vm292, %v284, %v289
    %v294 = vrsqrt.pop %v251
    %v295 = vmul.f32 %v294, %v251
    %v296 = vmul.f32 %v295, %v294
    %v297 = vmul.f32 0.5, %v296
    %v298 = vsub.f32 1.5, %v297
    %v299 = vmul.f32 %v294, %v298
    %vm300 = vweird.f32 %v251
    %vm301 = vweird.f32 %v294
    %vm302 = vmor %vm300, %vm301
    %v303 = vsel %vm302, %v294, %v299
    %v304 = vrsqrt.pop %v252
    %v305 = vmul.f32 %v304, %v252
    %v306 = vmul.f32 %v305, %v304
    %v307 = vmul.f32 0.5, %v306
    %v308 = vsub.f32 1.5, %v307
    %v309 = vmul.f32 %v304, %v308
    %vm310 = vweird.f32 %v252
    %vm311 = vweird.f32 %v304
    %vm312 = vmor %vm310, %vm311
    %v313 = vsel %vm312, %v304, %v309
    %v314 = vrsqrt.pop %v253
    %v315 = vmul.f32 %v314, %v253
    %v316 = vmul.f32 %v315, %v314
    %v317 = vmul.f32 0.5, %v316
    %v318 = vsub.f32 1.5, %v317
    %v319 = vmul.f32 %v314, %v318
    %vm320 = vweird.f32 %v253
    %vm321 = vweird.f32 %v314
    %vm322 = vmor %vm320, %vm321
    %v323 = vsel %vm322, %v314, %v319
    %v324 = vrsqrt.pop %v254
    %v325 = vmul.f32 %v324, %v254
    %v326 = vmul.f32 %v325, %v324
    %v327 = vmul.f32 0.5, %v326
    %v328 = vsub.f32 1.5, %v327
    %v329 = vmul.f32 %v324, %v328
    %vm330 = vweird.f32 %v254
    %vm331 = vweird.f32 %v324
    %vm332 = vmor %vm330, %vm331
    %v333 = vsel %vm332, %v324, %v329
    %v334 = vrsqrt.pop %v255
    %v335 = vmul.f32 %v334, %v255
    %v336 = vmul.f32 %v335, %v334
    %v337 = vmul.f32 0.5, %v336
    %v338 = vsub.f32 1.5, %v337
    %v339 = vmul.f32 %v334, %v338
    %vm340 = vweird.f32 %v255
    %vm341 = vweird.f32 %v334
    %vm342 = vmor %vm340, %vm341
    %v343 = vsel %vm342, %v334, %v339
    %v344 = vrsqrt.pop %v256
    %v345 = vmul.f32 %v344, %v256
    %v346 = vmul.f32 %v345, %v344
    %v347 = vmul.f32 0.5, %v346
    %v348 = vsub.f32 1.5, %v347
    %v349 = vmul.f32 %v344, %v348
    %vm350 = vweird.f32 %v256
    %vm351 = vweird.f32 %v344
    %vm352 = vmor %vm350, %vm351
    %v353 = vsel %vm352, %v344, %v349
    %v354 = vrsqrt.pop %v257
    %v355 = vmul.f32 %v354, %v257
    %v356 = vmul.f32 %v355, %v354
    %v357 = vmul.f32 0.5, %v356
    %v358 = vsub.f32 1.5, %v357
    %v359 = vmul.f32 %v354, %v358
    %vm360 = vweird.f32 %v257
    %vm361 = vweird.f32 %v354
    %vm362 = vmor %vm360, %vm361
    %v363 = vsel %vm362, %v354, %v359
    %v364 = vrsqrt.pop %v258
    %v365 = vmul.f32 %v364, %v258
    %v366 = vmul.f32 %v365, %v364
    %v367 = vmul.f32 0.5, %v366
    %v368 = vsub.f32 1.5, %v367
    %v369 = vmul.f32 %v364, %v368
    %vm370 = vweird.f32 %v258
    %vm371 = vweird.f32 %v364
    %vm372 = vmor %vm370, %vm371
    %v373 = vsel %vm372, %v364, %v369
    %v374 = vrsqrt.pop %v259
    %v375 = vmul.f32 %v374, %v259
    %v376 = vmul.f32 %v375, %v374
    %v377 = vmul.f32 0.5, %v376
    %v378 = vsub.f32 1.5, %v377
    %v379 = vmul.f32 %v374, %v378
    %vm380 = vweird.f32 %v259
    %vm381 = vweird.f32 %v374
    %vm382 = vmor %vm380, %vm381
    %v383 = vsel %vm382, %v374, %v379
    %v384 = vrsqrt.pop %v260
    %v385 = vmul.f32 %v384, %v260
    %v386 = vmul.f32 %v385, %v384
    %v387 = vmul.f32 0.5, %v386
    %v388 = vsub.f32 1.5, %v387
    %v389 = vmul.f32 %v384, %v388
    %vm390 = vweird.f32 %v260
    %vm391 = vweird.f32 %v384
    %vm392 = vmor %vm390, %vm391
    %v393 = vsel %vm392, %v384, %v389
    %v394 = vrsqrt.pop %v261
    %v395 = vmul.f32 %v394, %v261
    %v396 = vmul.f32 %v395, %v394
    %v397 = vmul.f32 0.5, %v396
    %v398 = vsub.f32 1.5, %v397
    %v399 = vmul.f32 %v394, %v398
    %vm400 = vweird.f32 %v261
    %vm401 = vweird.f32 %v394
    %vm402 = vmor %vm400, %vm401
    %v403 = vsel %vm402, %v394, %v399
    %v404 = vrsqrt.pop %v262
    %v405 = vmul.f32 %v404, %v262
    %v406 = vmul.f32 %v405, %v404
    %v407 = vmul.f32 0.5, %v406
    %v408 = vsub.f32 1.5, %v407
    %v409 = vmul.f32 %v404, %v408
    %vm410 = vweird.f32 %v262
    %vm411 = vweird.f32 %v404
    %vm412 = vmor %vm410, %vm411
    %v413 = vsel %vm412, %v404, %v409
    %v414 = vrsqrt.pop %v263
    %v415 = vmul.f32 %v414, %v263
    %v416 = vmul.f32 %v415, %v414
    %v417 = vmul.f32 0.5, %v416
    %v418 = vsub.f32 1.5, %v417
    %v419 = vmul.f32 %v414, %v418
    %vm420 = vweird.f32 %v263
    %vm421 = vweird.f32 %v414
    %vm422 = vmor %vm420, %vm421
    %v423 = vsel %vm422, %v414, %v419
    %v424 = vmul.f32 %v168, %v273
    %v425 = vmul.f32 %v169, %v283
    %v426 = vmul.f32 %v170, %v293
    %v427 = vmul.f32 %v171, %v303
    %v428 = vmul.f32 %v172, %v313
    %v429 = vmul.f32 %v173, %v323
    %v430 = vmul.f32 %v174, %v333
    %v431 = vmul.f32 %v175, %v343
    %v432 = vmul.f32 %v176, %v353
    %v433 = vmul.f32 %v177, %v363
    %v434 = vmul.f32 %v178, %v373
    %v435 = vmul.f32 %v179, %v383
    %v436 = vmul.f32 %v180, %v393
    %v437 = vmul.f32 %v181, %v403
    %v438 = vmul.f32 %v182, %v413
    %v439 = vmul.f32 %v183, %v423
    %v440 = vld [vmem:[#allocation5] sm:$0x1]
    %v442 = vperm.slane %v440, 0
    %v444 = vmul.f32 %v424, %v442
    %v445 = vmul.f32 %v425, %v442
    %v446 = vmul.f32 %v426, %v442
    %v447 = vmul.f32 %v427, %v442
    %v448 = vmul.f32 %v428, %v442
    %v449 = vmul.f32 %v429, %v442
    %v450 = vmul.f32 %v430, %v442
    %v451 = vmul.f32 %v431, %v442
    %v452 = vmul.f32 %v432, %v442
    %v453 = vmul.f32 %v433, %v442
    %v454 = vmul.f32 %v434, %v442
    %v455 = vmul.f32 %v435, %v442
    %v456 = vmul.f32 %v436, %v442
    %v457 = vmul.f32 %v437, %v442
    %v458 = vmul.f32 %v438, %v442
    %v459 = vmul.f32 %v439, %v442
    %v460 = vld [vmem:[%s2] sm:$0x1]
    %v462 = vperm.slane %v460, 0
    %v464 = vadd.f32 %v444, %v462
    %v465 = vadd.f32 %v445, %v462
    %v466 = vadd.f32 %v446, %v462
    %v467 = vadd.f32 %v447, %v462
    %v468 = vadd.f32 %v448, %v462
    %v469 = vadd.f32 %v449, %v462
    %v470 = vadd.f32 %v450, %v462
    %v471 = vadd.f32 %v451, %v462
    %v472 = vadd.f32 %v452, %v462
    %v473 = vadd.f32 %v453, %v462
    %v474 = vadd.f32 %v454, %v462
    %v475 = vadd.f32 %v455, %v462
    %v476 = vadd.f32 %v456, %v462
    %v477 = vadd.f32 %v457, %v462
    %v478 = vadd.f32 %v458, %v462
    %v479 = vadd.f32 %v459, %v462
    %v480 = vmax.f32 %v464, 0.0
    %v481 = vmax.f32 %v465, 0.0
    %v482 = vmax.f32 %v466, 0.0
    %v483 = vmax.f32 %v467, 0.0
    %v484 = vmax.f32 %v468, 0.0
    %v485 = vmax.f32 %v469, 0.0
    %v486 = vmax.f32 %v470, 0.0
    %v487 = vmax.f32 %v471, 0.0
    %v488 = vmax.f32 %v472, 0.0
    %v489 = vmax.f32 %v473, 0.0
    %v490 = vmax.f32 %v474, 0.0
    %v491 = vmax.f32 %v475, 0.0
    %v492 = vmax.f32 %v476, 0.0
    %v493 = vmax.f32 %v477, 0.0
    %v494 = vmax.f32 %v478, 0.0
    %v495 = vmax.f32 %v479, 0.0
    %v496 = vpack.c.bf16 %v480, %v480
    %v497 = vpack.c.bf16 %v481, %v481
    %v498 = vpack.c.bf16 %v482, %v482
    %v499 = vpack.c.bf16 %v483, %v483
    %v500 = vpack.c.bf16 %v484, %v484
    %v501 = vpack.c.bf16 %v485, %v485
    %v502 = vpack.c.bf16 %v486, %v486
    %v503 = vpack.c.bf16 %v487, %v487
    %v504 = vpack.c.bf16 %v488, %v488
    %v505 = vpack.c.bf16 %v489, %v489
    %v506 = vpack.c.bf16 %v490, %v490
    %v507 = vpack.c.bf16 %v491, %v491
    %v508 = vpack.c.bf16 %v492, %v492
    %v509 = vpack.c.bf16 %v493, %v493
    %v510 = vpack.c.bf16 %v494, %v494
    %v511 = vpack.c.bf16 %v495, %v495
    %512 = vst [vmem:[#allocation8] sm:$0xf] %v496
    %513 = vst [vmem:[#allocation8 + $0x4] sm:$0xf] %v497
    %514 = vst [vmem:[#allocation8 + $0x8] sm:$0xf] %v498
    %515 = vst [vmem:[#allocation8 + $0xc] sm:$0xf] %v499
    %516 = vst [vmem:[#allocation8 + $0x10] sm:$0xf] %v500
    %517 = vst [vmem:[#allocation8 + $0x14] sm:$0xf] %v501
    %518 = vst [vmem:[#allocation8 + $0x18] sm:$0xf] %v502
    %519 = vst [vmem:[#allocation8 + $0x1c] sm:$0xf] %v503
    %520 = vst [vmem:[#allocation8 + $0x20] sm:$0xf] %v504
    %521 = vst [vmem:[#allocation8 + $0x24] sm:$0xf] %v505
    %522 = vst [vmem:[#allocation8 + $0x28] sm:$0xf] %v506
    %523 = vst [vmem:[#allocation8 + $0x2c] sm:$0xf] %v507
    %524 = vst [vmem:[#allocation8 + $0x30] sm:$0xf] %v508
    %525 = vst [vmem:[#allocation8 + $0x34] sm:$0xf] %v509
    %526 = vst [vmem:[#allocation8 + $0x38] sm:$0xf] %v510
    %527 = vst [vmem:[#allocation8 + $0x3c] sm:$0xf] %v511
    %v528 = vld [vmem:[#allocation7] sm:$0xf]
    %v529 = vld [vmem:[#allocation7 + $0x4] sm:$0xf]
    %v530 = vld [vmem:[#allocation7 + $0x8] sm:$0xf]
    %v531 = vld [vmem:[#allocation7 + $0xc] sm:$0xf]
    %v532 = vld [vmem:[#allocation7 + $0x10] sm:$0xf]
    %v533 = vld [vmem:[#allocation7 + $0x14] sm:$0xf]
    %v534 = vld [vmem:[#allocation7 + $0x18] sm:$0xf]
    %v535 = vld [vmem:[#allocation7 + $0x1c] sm:$0xf]
    %v536 = vld [vmem:[#allocation7 + $0x20] sm:$0xf]
    %v537 = vld [vmem:[#allocation7 + $0x24] sm:$0xf]
    %v538 = vld [vmem:[#allocation7 + $0x28] sm:$0xf]
    %v539 = vld [vmem:[#allocation7 + $0x2c] sm:$0xf]
    %v540 = vld [vmem:[#allocation7 + $0x30] sm:$0xf]
    %v541 = vld [vmem:[#allocation7 + $0x34] sm:$0xf]
    %v542 = vld [vmem:[#allocation7 + $0x38] sm:$0xf]
    %v543 = vld [vmem:[#allocation7 + $0x3c] sm:$0xf]
    %v544 = vld [vmem:[%s4] sm:$0x1]
    %v546 = vperm.slane %v544, 0
    %v564 = vunpack.c.l.b16 %v496
    %v565 = vunpack.c.l.b16 %v497
    %v566 = vunpack.c.l.b16 %v498
    %v567 = vunpack.c.l.b16 %v499
    %v568 = vunpack.c.l.b16 %v500
    %v569 = vunpack.c.l.b16 %v501
    %v570 = vunpack.c.l.b16 %v502
    %v571 = vunpack.c.l.b16 %v503
    %v572 = vunpack.c.l.b16 %v504
    %v573 = vunpack.c.l.b16 %v505
    %v574 = vunpack.c.l.b16 %v506
    %v575 = vunpack.c.l.b16 %v507
    %v576 = vunpack.c.l.b16 %v508
    %v577 = vunpack.c.l.b16 %v509
    %v578 = vunpack.c.l.b16 %v510
    %v579 = vunpack.c.l.b16 %v511
    %v580 = vpack.c.b16 %v565, %v564
    %v581 = vpack.c.b16 %v567, %v566
    %v582 = vpack.c.b16 %v569, %v568
    %v583 = vpack.c.b16 %v571, %v570
    %v584 = vpack.c.b16 %v573, %v572
    %v585 = vpack.c.b16 %v575, %v574
    %v586 = vpack.c.b16 %v577, %v576
    %v587 = vpack.c.b16 %v579, %v578
    %v612 = vunpack.c.l.b16 %v528
    %v613 = vunpack.c.l.b16 %v529
    %v614 = vunpack.c.l.b16 %v530
    %v615 = vunpack.c.l.b16 %v531
    %v616 = vunpack.c.l.b16 %v532
    %v617 = vunpack.c.l.b16 %v533
    %v618 = vunpack.c.l.b16 %v534
    %v619 = vunpack.c.l.b16 %v535
    %v620 = vunpack.c.l.b16 %v536
    %v621 = vunpack.c.l.b16 %v537
    %v622 = vunpack.c.l.b16 %v538
    %v623 = vunpack.c.l.b16 %v539
    %v624 = vunpack.c.l.b16 %v540
    %v625 = vunpack.c.l.b16 %v541
    %v626 = vunpack.c.l.b16 %v542
    %v627 = vunpack.c.l.b16 %v543
    %v628 = vpack.c.b16 %v613, %v612
    %v629 = vpack.c.b16 %v615, %v614
    %v630 = vpack.c.b16 %v617, %v616
    %v631 = vpack.c.b16 %v619, %v618
    %v632 = vpack.c.b16 %v621, %v620
    %v633 = vpack.c.b16 %v623, %v622
    %v634 = vpack.c.b16 %v625, %v624
    %v635 = vpack.c.b16 %v627, %v626
    %644 = vmatpush.bf16.msra.mxu0 %v635
    %645 = vmatpush.bf16.msra.mxu0 %v634
    %646 = vmatpush.bf16.msra.mxu0 %v633
    %647 = vmatpush.bf16.msra.mxu0 %v632
    %648 = vmatpush.bf16.msra.mxu0 %v631
    %649 = vmatpush.bf16.msra.mxu0 %v630
    %650 = vmatpush.bf16.msra.mxu0 %v629
    %651 = vmatpush.bf16.msra.mxu0 %v628
    %652 = vmatmul.bf16.gmra.mxu0 %v580
    %v653 = vpop.f32.mrf.mxu0
    %v654 = vadd.f32 %v546, %v653
    %v655 = vpop.f32.mrf.mxu0
    %v656 = vadd.f32 %v546, %v655
    %657 = vmatmul.bf16.gmra.mxu0 %v581
    %v658 = vpop.f32.mrf.mxu0
    %v659 = vadd.f32 %v546, %v658
    %v660 = vpop.f32.mrf.mxu0
    %v661 = vadd.f32 %v546, %v660
    %662 = vmatmul.bf16.gmra.mxu0 %v582
    %v663 = vpop.f32.mrf.mxu0
    %v664 = vadd.f32 %v546, %v663
    %v665 = vpop.f32.mrf.mxu0
    %v666 = vadd.f32 %v546, %v665
    %667 = vmatmul.bf16.gmra.mxu0 %v583
    %v668 = vpop.f32.mrf.mxu0
    %v669 = vadd.f32 %v546, %v668
    %v670 = vpop.f32.mrf.mxu0
    %v671 = vadd.f32 %v546, %v670
    %672 = vmatmul.bf16.gmra.mxu0 %v584
    %v673 = vpop.f32.mrf.mxu0
    %v674 = vadd.f32 %v546, %v673
    %v675 = vpop.f32.mrf.mxu0
    %v676 = vadd.f32 %v546, %v675
    %677 = vmatmul.bf16.gmra.mxu0 %v585
    %v678 = vpop.f32.mrf.mxu0
    %v679 = vadd.f32 %v546, %v678
    %v680 = vpop.f32.mrf.mxu0
    %v681 = vadd.f32 %v546, %v680
    %682 = vmatmul.bf16.gmra.mxu0 %v586
    %v683 = vpop.f32.mrf.mxu0
    %v684 = vadd.f32 %v546, %v683
    %v685 = vpop.f32.mrf.mxu0
    %v686 = vadd.f32 %v546, %v685
    %687 = vmatmul.bf16.gmra.mxu0 %v587
    %v688 = vpop.f32.mrf.mxu0
    %v689 = vadd.f32 %v546, %v688
    %v690 = vpop.f32.mrf.mxu0
    %v691 = vadd.f32 %v546, %v690
    %692 = vdwg.mxu0
    %v693 = vmax.f32 %v654, 0.0
    %v694 = vmax.f32 %v656, 0.0
    %v695 = vmax.f32 %v659, 0.0
    %v696 = vmax.f32 %v661, 0.0
    %v697 = vmax.f32 %v664, 0.0
    %v698 = vmax.f32 %v666, 0.0
    %v699 = vmax.f32 %v669, 0.0
    %v700 = vmax.f32 %v671, 0.0
    %v701 = vmax.f32 %v674, 0.0
    %v702 = vmax.f32 %v676, 0.0
    %v703 = vmax.f32 %v679, 0.0
    %v704 = vmax.f32 %v681, 0.0
    %v705 = vmax.f32 %v684, 0.0
    %v706 = vmax.f32 %v686, 0.0
    %v707 = vmax.f32 %v689, 0.0
    %v708 = vmax.f32 %v691, 0.0
    %v709 = vpack.c.bf16 %v693, %v693
    %v710 = vpack.c.bf16 %v694, %v694
    %v711 = vpack.c.bf16 %v695, %v695
    %v712 = vpack.c.bf16 %v696, %v696
    %v713 = vpack.c.bf16 %v697, %v697
    %v714 = vpack.c.bf16 %v698, %v698
    %v715 = vpack.c.bf16 %v699, %v699
    %v716 = vpack.c.bf16 %v700, %v700
    %v717 = vpack.c.bf16 %v701, %v701
    %v718 = vpack.c.bf16 %v702, %v702
    %v719 = vpack.c.bf16 %v703, %v703
    %v720 = vpack.c.bf16 %v704, %v704
    %v721 = vpack.c.bf16 %v705, %v705
    %v722 = vpack.c.bf16 %v706, %v706
    %v723 = vpack.c.bf16 %v707, %v707
    %v724 = vpack.c.bf16 %v708, %v708
    %725 = vst [vmem:[#allocation9] sm:$0xf] %v709
    %726 = vst [vmem:[#allocation9 + $0x4] sm:$0xf] %v710
    %727 = vst [vmem:[#allocation9 + $0x8] sm:$0xf] %v711
    %728 = vst [vmem:[#allocation9 + $0xc] sm:$0xf] %v712
    %729 = vst [vmem:[#allocation9 + $0x10] sm:$0xf] %v713
    %730 = vst [vmem:[#allocation9 + $0x14] sm:$0xf] %v714
    %731 = vst [vmem:[#allocation9 + $0x18] sm:$0xf] %v715
    %732 = vst [vmem:[#allocation9 + $0x1c] sm:$0xf] %v716
    %733 = vst [vmem:[#allocation9 + $0x20] sm:$0xf] %v717
    %734 = vst [vmem:[#allocation9 + $0x24] sm:$0xf] %v718
    %735 = vst [vmem:[#allocation9 + $0x28] sm:$0xf] %v719
    %736 = vst [vmem:[#allocation9 + $0x2c] sm:$0xf] %v720
    %737 = vst [vmem:[#allocation9 + $0x30] sm:$0xf] %v721
    %738 = vst [vmem:[#allocation9 + $0x34] sm:$0xf] %v722
    %739 = vst [vmem:[#allocation9 + $0x38] sm:$0xf] %v723
    %740 = vst [vmem:[#allocation9 + $0x3c] sm:$0xf] %v724
    // Predicated region
    $region34: #{tpu_custom_call.1} parent=1 // pred_check
      _
    $region35: #{tpu_custom_call.1} parent=1 // pred_check_branch
      %742 = sbr.rel (0) target = $region37
    $region36: #{tpu_custom_call.1} parent=1 // pred_region
      %744 = vsyncadd [#allocation4], 0
      %s745 = sshll.u32 [#allocation8], 4
      %s746 = int_to_ptr.vmem [resolvable:$true] %s745
      %s747 = sshll.u32 %s5, 4
      %s748 = int_to_ptr.hbm [resolvable:$true] %s747
      %753 = dma.vmem_to_hbm [thread:$0]  %s746, 1024, %s748, [#allocation4], 64, 64, 4
    $region37: #{tpu_custom_call.1} parent=1 // pred_fallthru
      _
    // Predicated region
    $region38: #{tpu_custom_call.1} parent=1 // pred_check
      _
    $region39: #{tpu_custom_call.1} parent=1 // pred_check_branch
      %755 = sbr.rel (0) target = $region41
    $region40: #{tpu_custom_call.1} parent=1 // pred_region
      %757 = vsyncadd [#allocation10], 0
      %s758 = sshll.u32 [#allocation9], 4
      %s759 = int_to_ptr.vmem [resolvable:$true] %s758
      %s760 = sshll.u32 %s6, 4
      %s761 = int_to_ptr.hbm [resolvable:$true] %s760
      %766 = dma.vmem_to_hbm [thread:$0]  %s759, 1024, %s761, [#allocation10], 64, 64, 4
    $region41: #{tpu_custom_call.1} parent=1 // pred_fallthru
      _
    // Predicated region
    $region42: #{tpu_custom_call.1} parent=1 // pred_check
      _
    $region43: #{tpu_custom_call.1} parent=1 // pred_check_branch
      %768 = sbr.rel (0) target = $region45
    $region44: #{tpu_custom_call.1} parent=1 // pred_region
      %770 = dma.done [#allocation4], 1024
    $region45: #{tpu_custom_call.1} parent=1 // pred_fallthru
      _
    // Predicated region
    $region46: #{tpu_custom_call.1} parent=1 // pred_check
      _
    $region47: #{tpu_custom_call.1} parent=1 // pred_check_branch
      %772 = sbr.rel (0) target = $region49
    $region48: #{tpu_custom_call.1} parent=1 // pred_region
      %774 = dma.done [#allocation10], 1024
    $region49: #{tpu_custom_call.1} parent=1 // pred_fallthru
      _
    %775 = vsyncpa [#allocation3], 1
    %776 = vsyncpa [#allocation6], 1
    %777 = vsyncpa [#allocation4], 1
    %778 = vsyncpa [#allocation10], 1

</llo_original>
